<compile_context>
chip_gen: v6e
topology: v6e:2x2x1
jax: 0.10.0
libtpu: 0.0.40
codegen_flags: <defaults>
</compile_context>

<pallas_src>
import functools

import jax
import jax.numpy as jnp
from jax.experimental import pallas as pl
from jax.experimental.pallas import tpu as pltpu


# ----------------------------------------------------------------------------
# Helpers
# ----------------------------------------------------------------------------
def _round_up(v, m):
    return (v + m - 1) // m * m


def _augmentation(key, w_shape, out_dim, *, p=None, a=None, b=None, sigma=None):
    """Host-side randoms + runtime parameter, mirroring augment_weights()."""
    kp, kw, kb = jax.random.split(key, 3)
    if sigma is not None:
        mode = "gaussian"
        param = jnp.float32(sigma)
        rand_w = jax.random.normal(kw, w_shape, dtype=jnp.float32)
        rand_b = jax.random.normal(kb, (1, out_dim), dtype=jnp.float32)
    else:
        mode = "dropout"
        if p is not None:
            param = jnp.float32(p)
        else:
            # Beta dropout: p stays a traced device scalar (no host sync, and
            # the compiled kernel is identical for every sampled p).
            param = jax.random.beta(kp, a, b).astype(jnp.float32)
        rand_w = jax.random.uniform(kw, w_shape, dtype=jnp.float32)
        rand_b = jax.random.uniform(kb, (1, out_dim), dtype=jnp.float32)
    return mode, param, rand_w, rand_b


# ----------------------------------------------------------------------------
# Pallas kernel: augment weight tile (dropout OR gaussian) + tiled F.linear
# ----------------------------------------------------------------------------
def _bayes_linear_kernel(param_ref, x_ref, w_ref, rw_ref, b_ref, rb_ref,
                         o_ref, acc_ref, *, mode, use_bf16):
    k = pl.program_id(2)

    @pl.when(k == 0)
    def _init():
        acc_ref[...] = jnp.zeros_like(acc_ref)

    pv = param_ref[0]                        # p (dropout) or sigma (gaussian)
    w = w_ref[...].astype(jnp.float32)       # (TN, TK)  — PyTorch (OUT, IN) layout

    if mode == "dropout":
        # F.dropout(training=True): zero with prob p, scale survivors by 1/(1-p).
        # Guard p == 1 (possible from Beta sampling): everything is zeroed.
        scale = jnp.where(pv < 1.0, 1.0 / (1.0 - pv), 0.0)
        w_aug = jnp.where(rw_ref[...] >= pv, w * scale, 0.0)
    else:  # gaussian
        w_aug = w + rw_ref[...].astype(jnp.float32) * pv

    x = x_ref[...].astype(jnp.float32)       # (TB, TK)
    if use_bf16:
        x = x.astype(jnp.bfloat16)
        w_aug = w_aug.astype(jnp.bfloat16)

    # Contract x's last dim against the weight's last (IN) dim — no transpose.
    acc_ref[...] += jax.lax.dot_general(
        x, w_aug,
        dimension_numbers=(((1,), (1,)), ((), ())),
        preferred_element_type=jnp.float32,
    )

    @pl.when(k == pl.num_programs(2) - 1)
    def _finish():
        bias = b_ref[...].astype(jnp.float32)     # (1, TN)
        if mode == "dropout":
            scale = jnp.where(pv < 1.0, 1.0 / (1.0 - pv), 0.0)
            b_aug = jnp.where(rb_ref[...] >= pv, bias * scale, 0.0)
        else:
            b_aug = bias + rb_ref[...].astype(jnp.float32) * pv
        o_ref[...] = (acc_ref[...] + b_aug).astype(o_ref.dtype)


# ----------------------------------------------------------------------------
# Host-side wrapper: mode selection, padding, tiling, pallas_call plumbing
# ----------------------------------------------------------------------------
def bayesian_linear(x, weight, bias, *, p=None, a=None, b=None, sigma=None,
                    key=None, tb=128, tn=256, tk=512, use_bf16=False):
    """Pallas equivalent of ModuleBayesianWrapper(nn.Linear(...)).forward(x)."""
    pab_check = (
        "You can either specify the following options (exclusively):\n"
        " - p (simple dropout)\n - a and b (beta dropout)\n - sigma (gaussian dropout)"
    )
    valid = (
        (p is not None and a is None and b is None and sigma is None)
        or (p is None and a is not None and b is not None and sigma is None)
        or (p is None and a is None and b is None and sigma is not None)
    )
    assert valid, pab_check

    if key is None:
        key = jax.random.PRNGKey(0)

    B, IN = x.shape
    OUT, IN_w = weight.shape
    assert IN == IN_w
    assert bias.shape == (OUT,)

    # Tile sizes: lane dim multiples of 128, sublane multiples of 8.
    TB = min(tb, _round_up(B, 8))
    TN = min(tn, _round_up(OUT, 128))
    TK = min(tk, _round_up(IN, 128))
    Bp = _round_up(B, TB)
    OUTp = _round_up(OUT, TN)
    INp = _round_up(IN, TK)

    xp = jnp.zeros((Bp, INp), x.dtype).at[:B, :IN].set(x)
    wp = jnp.zeros((OUTp, INp), weight.dtype).at[:OUT, :IN].set(weight)
    bp = jnp.zeros((1, OUTp), bias.dtype).at[0, :OUT].set(bias)

    mode, param, rand_w, rand_b = _augmentation(
        key, (OUTp, INp), OUTp, p=p, a=a, b=b, sigma=sigma)
    params = jnp.reshape(param, (1,)).astype(jnp.float32)

    grid = (Bp // TB, OUTp // TN, INp // TK)
    kernel = functools.partial(_bayes_linear_kernel, mode=mode, use_bf16=use_bf16)

    yp = pl.pallas_call(
        kernel,
        out_shape=jax.ShapeDtypeStruct((Bp, OUTp), x.dtype),
        grid=grid,
        in_specs=[
            pl.BlockSpec(memory_space=pltpu.MemorySpace.SMEM),    # p / sigma scalar
            pl.BlockSpec((TB, TK), lambda i, j, k: (i, k)),       # x tile
            pl.BlockSpec((TN, TK), lambda i, j, k: (j, k)),       # weight tile (OUT, IN)
            pl.BlockSpec((TN, TK), lambda i, j, k: (j, k)),       # rand for weight tile
            pl.BlockSpec((1, TN), lambda i, j, k: (0, j)),        # bias tile
            pl.BlockSpec((1, TN), lambda i, j, k: (0, j)),        # rand for bias tile
        ],
        out_specs=pl.BlockSpec((TB, TN), lambda i, j, k: (i, j)),
        scratch_shapes=[pltpu.VMEM((TB, TN), jnp.float32)],
        compiler_params=pltpu.CompilerParams(
            dimension_semantics=("parallel", "parallel", "arbitrary"),
            vmem_limit_bytes=32 * 1024 * 1024,
        ),
    )(params, xp, wp, rand_w, bp, rand_b)

    return yp[:B, :OUT]


class ModuleBayesianWrapperLinear:
    """Thin host-side mirror of ModuleBayesianWrapper for an nn.Linear layer."""

    def __init__(self, weight, bias, p=None, a=None, b=None, sigma=None,
                 tile=(128, 256, 512), use_bf16=False):
        self.weight = weight
        self.bias = bias
        self.p, self.a, self.b, self.sigma = p, a, b, sigma
        self.tile = tile
        self.use_bf16 = use_bf16

    def __call__(self, x, key=None):
        return bayesian_linear(
            x, self.weight, self.bias,
            p=self.p, a=self.a, b=self.b, sigma=self.sigma,
            key=key, tb=self.tile[0], tn=self.tile[1], tk=self.tile[2],
            use_bf16=self.use_bf16,
        )


# ----------------------------------------------------------------------------
# Demo / smoke test with a pure-JAX reference of the module's forward
# ----------------------------------------------------------------------------
if __name__ == "__main__":
    B, IN, OUT = 8, 256, 256   # multiples of (8, 128) so padding is identity

    key = jax.random.PRNGKey(0)
    kx, kw_, kb_ = jax.random.split(key, 3)

    # Deterministic "nn.Linear"-style parameter init (uniform +/- 1/sqrt(IN)).
    bound = 1.0 / jnp.sqrt(jnp.float32(IN))
    x = jax.random.normal(kx, (B, IN), dtype=jnp.float32)
    weight = jax.random.uniform(kw_, (OUT, IN), minval=-bound, maxval=bound,
                                dtype=jnp.float32)
    bias = jax.random.uniform(kb_, (OUT,), minval=-bound, maxval=bound,
                              dtype=jnp.float32)

    def reference(x, weight, bias, key, **cfg):
        mode, param, rand_w, rand_b = _augmentation(
            key, weight.shape, weight.shape[0],
            p=cfg.get("p"), a=cfg.get("a"), b=cfg.get("b"), sigma=cfg.get("sigma"))
        if mode == "dropout":
            scale = jnp.where(param < 1.0, 1.0 / (1.0 - param), 0.0)
            w_aug = jnp.where(rand_w >= param, weight * scale, 0.0)
            b_aug = jnp.where(rand_b[0] >= param, bias * scale, 0.0)
        else:
            w_aug = weight + rand_w * param
            b_aug = bias + rand_b[0] * param
        return x @ w_aug.T + b_aug

    cases = [
        dict(p=0.3),            # simple dropout
        dict(sigma=0.1),        # gaussian
        dict(a=2.0, b=5.0),     # beta dropout (p sampled on device, runtime scalar)
    ]
    # Small tiles so the demo exercises a real (1, 2, 2) grid with accumulation.
    for i, cfg in enumerate(cases):
        kcase = jax.random.PRNGKey(100 + i)
        mod = ModuleBayesianWrapperLinear(weight, bias, tile=(8, 128, 128), **cfg)
        y = jax.block_until_ready(mod(x, key=kcase))
        y_ref = reference(x, weight, bias, kcase, **cfg)
        assert y.shape == (B, OUT)
        assert jnp.allclose(y, y_ref, atol=1e-3, rtol=1e-3), f"mismatch for {cfg}"

    print("KERNEL_OK")
</pallas_src>

<mosaic_0001>
module attributes {stable_mosaic.version = 11 : i64} {
  func.func @_bayes_linear_kernel(%arg0: i32, %arg1: i32, %arg2: i32, %arg3: memref<1xf32, #tpu.memory_space<smem>>, %arg4: memref<8x128xf32, #tpu.memory_space<vmem>>, %arg5: memref<128x128xf32, #tpu.memory_space<vmem>>, %arg6: memref<128x128xf32, #tpu.memory_space<vmem>>, %arg7: memref<1x128xf32, #tpu.memory_space<vmem>>, %arg8: memref<1x128xf32, #tpu.memory_space<vmem>>, %arg9: memref<8x128xf32, #tpu.memory_space<vmem>>, %arg10: memref<8x128xf32, #tpu.memory_space<vmem>>) attributes {dimension_semantics = [#tpu.dimension_semantics<parallel>, #tpu.dimension_semantics<parallel>, #tpu.dimension_semantics<arbitrary>], iteration_bounds = array<i64: 1, 2, 2>, scalar_prefetch = 0 : i64, scratch_operands = 1 : i64, tpu.core_type = #tpu.core_type<tc>, window_params = [{transform_indices = @transform_0, window_bounds = array<i64: 1>}, {transform_indices = @transform_1, window_bounds = array<i64: 8, 128>}, {transform_indices = @transform_2, window_bounds = array<i64: 128, 128>}, {transform_indices = @transform_3, window_bounds = array<i64: 128, 128>}, {transform_indices = @transform_4, window_bounds = array<i64: 1, 128>}, {transform_indices = @transform_5, window_bounds = array<i64: 1, 128>}, {transform_indices = @transform_6, window_bounds = array<i64: 8, 128>}]} {
    %c0_i32 = arith.constant 0 : i32
    %0 = arith.cmpi eq, %arg2, %c0_i32 : i32
    %1 = arith.extui %0 : i1 to i32
    %c0_i32_0 = arith.constant 0 : i32
    %2 = arith.cmpi ne, %1, %c0_i32_0 : i32
    scf.if %2 {
      %cst_17 = arith.constant 0.000000e+00 : f32
      %24 = vector.broadcast %cst_17 : f32 to vector<8x128xf32>
      %c0_18 = arith.constant 0 : index
      %c0_19 = arith.constant 0 : index
      %25 = vector.load %arg10[%c0_18, %c0_19] : memref<8x128xf32, #tpu.memory_space<vmem>>, vector<8x128xf32>
      tpu.vector_store %arg10[%c0_18, %c0_19], %24 {strides = array<i32>} : memref<8x128xf32, #tpu.memory_space<vmem>>, vector<8x128xf32>,
    } else {
    }
    %c0 = arith.constant 0 : index
    %3 = memref.load %arg3[%c0] : memref<1xf32, #tpu.memory_space<smem>>
    %c0_1 = arith.constant 0 : index
    %c0_2 = arith.constant 0 : index
    %4 = vector.load %arg5[%c0_1, %c0_2] : memref<128x128xf32, #tpu.memory_space<vmem>>, vector<128x128xf32>
    %cst = arith.constant 1.000000e+00 : f32
    %5 = arith.cmpf olt, %3, %cst : f32
    %cst_3 = arith.constant 1.000000e+00 : f32
    %6 = arith.subf %cst_3, %3 : f32
    %cst_4 = arith.constant 1.000000e+00 : f32
    %7 = arith.divf %cst_4, %6 : f32
    %cst_5 = arith.constant 0.000000e+00 : f32
    %8 = arith.select %5, %7, %cst_5 : f32
    %c0_6 = arith.constant 0 : index
    %c0_7 = arith.constant 0 : index
    %9 = vector.load %arg6[%c0_6, %c0_7] : memref<128x128xf32, #tpu.memory_space<vmem>>, vector<128x128xf32>
    %10 = vector.broadcast %3 : f32 to vector<128x128xf32>
    %11 = arith.cmpf oge, %9, %10 : vector<128x128xf32>
    %12 = vector.broadcast %8 : f32 to vector<128x128xf32>
    %13 = arith.mulf %4, %12 : vector<128x128xf32>
    %cst_8 = arith.constant 0.000000e+00 : f32
    %14 = vector.broadcast %cst_8 : f32 to vector<128x128xf32>
    %15 = arith.select %11, %13, %14 : vector<128x128xi1>, vector<128x128xf32>
    %c0_9 = arith.constant 0 : index
    %c0_10 = arith.constant 0 : index
    %16 = vector.load %arg4[%c0_9, %c0_10] : memref<8x128xf32, #tpu.memory_space<vmem>>, vector<8x128xf32>
    %c0_11 = arith.constant 0 : index
    %c0_12 = arith.constant 0 : index
    %17 = vector.load %arg10[%c0_11, %c0_12] : memref<8x128xf32, #tpu.memory_space<vmem>>, vector<8x128xf32>
    %cst_13 = arith.constant dense<0.000000e+00> : vector<8x128xf32>
    %18 = tpu.matmul %16, %15, %cst_13 {dimension_numbers = #tpu.dot_dimension_numbers<[1], [1], [0], [0], [0, 0, 1, 0], [], []>} : vector<8x128xf32>, vector<128x128xf32>, vector<8x128xf32> -> vector<8x128xf32>
    %19 = arith.addf %17, %18 : vector<8x128xf32>
    %c0_14 = arith.constant 0 : index
    %c0_15 = arith.constant 0 : index
    %20 = vector.load %arg10[%c0_14, %c0_15] : memref<8x128xf32, #tpu.memory_space<vmem>>, vector<8x128xf32>
    tpu.vector_store %arg10[%c0_14, %c0_15], %19 {strides = array<i32>} : memref<8x128xf32, #tpu.memory_space<vmem>>, vector<8x128xf32>,
    %c1_i32 = arith.constant 1 : i32
    %21 = arith.cmpi eq, %arg2, %c1_i32 : i32
    %22 = arith.extui %21 : i1 to i32
    %c0_i32_16 = arith.constant 0 : i32
    %23 = arith.cmpi ne, %22, %c0_i32_16 : i32
    scf.if %23 {
      %c0_17 = arith.constant 0 : index
      %c0_18 = arith.constant 0 : index
      %24 = vector.load %arg7[%c0_17, %c0_18] : memref<1x128xf32, #tpu.memory_space<vmem>>, vector<1x128xf32>
      %cst_19 = arith.constant 1.000000e+00 : f32
      %25 = arith.cmpf olt, %3, %cst_19 : f32
      %cst_20 = arith.constant 1.000000e+00 : f32
      %26 = arith.subf %cst_20, %3 : f32
      %cst_21 = arith.constant 1.000000e+00 : f32
      %27 = arith.divf %cst_21, %26 : f32
      %cst_22 = arith.constant 0.000000e+00 : f32
      %28 = arith.select %25, %27, %cst_22 : f32
      %c0_23 = arith.constant 0 : index
      %c0_24 = arith.constant 0 : index
      %29 = vector.load %arg8[%c0_23, %c0_24] : memref<1x128xf32, #tpu.memory_space<vmem>>, vector<1x128xf32>
      %30 = vector.broadcast %3 : f32 to vector<1x128xf32>
      %31 = arith.cmpf oge, %29, %30 : vector<1x128xf32>
      %32 = vector.broadcast %28 : f32 to vector<1x128xf32>
      %33 = arith.mulf %24, %32 : vector<1x128xf32>
      %cst_25 = arith.constant 0.000000e+00 : f32
      %34 = vector.broadcast %cst_25 : f32 to vector<1x128xf32>
      %35 = arith.select %31, %33, %34 : vector<1x128xi1>, vector<1x128xf32>
      %c0_26 = arith.constant 0 : index
      %c0_27 = arith.constant 0 : index
      %36 = vector.load %arg10[%c0_26, %c0_27] : memref<8x128xf32, #tpu.memory_space<vmem>>, vector<8x128xf32>
      %37 = vector.broadcast %35 : vector<1x128xf32> to vector<8x128xf32>
      %38 = arith.addf %36, %37 : vector<8x128xf32>
      %c0_28 = arith.constant 0 : index
      %c0_29 = arith.constant 0 : index
      %39 = vector.load %arg9[%c0_28, %c0_29] : memref<8x128xf32, #tpu.memory_space<vmem>>, vector<8x128xf32>
      tpu.vector_store %arg9[%c0_28, %c0_29], %38 {strides = array<i32>} : memref<8x128xf32, #tpu.memory_space<vmem>>, vector<8x128xf32>,
    } else {
    }
    return
  }
  func.func @transform_0(%arg0: i32, %arg1: i32, %arg2: i32) -> i32 {
    %c0_i32 = arith.constant 0 : i32
    %c0_i32_0 = arith.constant 0 : i32
    return %c0_i32 : i32
  }
  func.func @transform_1(%arg0: i32, %arg1: i32, %arg2: i32) -> (i32, i32) {
    %c0_i32 = arith.constant 0 : i32
    return %arg0, %arg2 : i32, i32
  }
  func.func @transform_2(%arg0: i32, %arg1: i32, %arg2: i32) -> (i32, i32) {
    %c0_i32 = arith.constant 0 : i32
    return %arg1, %arg2 : i32, i32
  }
  func.func @transform_3(%arg0: i32, %arg1: i32, %arg2: i32) -> (i32, i32) {
    %c0_i32 = arith.constant 0 : i32
    return %arg1, %arg2 : i32, i32
  }
  func.func @transform_4(%arg0: i32, %arg1: i32, %arg2: i32) -> (i32, i32) {
    %c0_i32 = arith.constant 0 : i32
    %c0_i32_0 = arith.constant 0 : i32
    return %c0_i32, %arg1 : i32, i32
  }
  func.func @transform_5(%arg0: i32, %arg1: i32, %arg2: i32) -> (i32, i32) {
    %c0_i32 = arith.constant 0 : i32
    %c0_i32_0 = arith.constant 0 : i32
    return %c0_i32, %arg1 : i32, i32
  }
  func.func @transform_6(%arg0: i32, %arg1: i32, %arg2: i32) -> (i32, i32) {
    %c0_i32 = arith.constant 0 : i32
    return %arg0, %arg1 : i32, i32
  }
}

</mosaic_0001>

<llo_original>
// kernel: tpu_custom_call.1
$region0: #{tpu_custom_call.1}
  #allocation0 [shape = 'u32[]', space=smem, size = 0x4, offset = 0x4, fixed_abs, tag = 'smem constant byte address 0x4 - core index']
  #allocation1 [shape = 'u32[144,128]{1,0:T(1,128)}', space=vmem, size = 0x12000, scoped, tag = 'internal scratch']
  #allocation2 [shape = 'f32[8,128]{1,0:T(8,128)}', space=vmem, size = 0x1000, scoped, tag = 'scratch operand']
  #allocation3 [shape = 'f32[1]{0:T(128)S(6)}', space=smem, size = 0x200, scoped, tag = 'scoped memory for tpu_custom_call.1']
  %s0 = inlined_call_operand.<no memory space> [shape: f32[1], index: 0, kind: input, shape index: {}]
  %s1 = inlined_call_operand.hbm [shape: f32[8,256], index: 1, kind: input, shape index: {}]
  %s2 = inlined_call_operand.hbm [shape: f32[256,256], index: 2, kind: input, shape index: {}]
  %s3 = inlined_call_operand.hbm [shape: f32[256,256], index: 3, kind: input, shape index: {}]
  %s4 = inlined_call_operand.vmem [shape: f32[1,256], index: 4, kind: input, shape index: {}]
  %s5 = inlined_call_operand.vmem [shape: f32[1,256], index: 5, kind: input, shape index: {}]
  %s6 = inlined_call_operand.hbm [shape: f32[8,256], index: 6, kind: output, shape index: {}]
  %s7 = sld [smem:[#allocation0]]
  $region77: #{tpu_custom_call.1} parent=0
    _
  %s9 = ssub.s32 1, %s7
  %s10 = scalar_select 0, %s9, %s7
  %11 = sst [smem:[#allocation3]] %s0
  $region1: #{tpu_custom_call.1} parent=0
    #allocation4 [shape = 'u8[8192]{0}', space=vmem, size = 0x2000, scoped, tag = 'input window, operand 1']
    #allocation5 [shape = 's32[2]{0}', space=sflag, size = 0x8, scoped, tag = 'scoped memory for tpu_custom_call.1']
    #allocation6 [shape = 's32[2]{0}', space=sflag, size = 0x8, scoped, tag = 'scoped memory for tpu_custom_call.1']
    #allocation7 [shape = 'u8[131072]{0}', space=vmem, size = 0x20000, scoped, tag = 'input window, operand 2']
    #allocation8 [shape = 's32[2]{0}', space=sflag, size = 0x8, scoped, tag = 'scoped memory for tpu_custom_call.1']
    #allocation9 [shape = 'u8[131072]{0}', space=vmem, size = 0x20000, scoped, tag = 'input window, operand 3']
    #allocation10 [shape = 'u8[8192]{0}', space=vmem, size = 0x2000, scoped, tag = 'output window, operand 0']
    %12 = vsyncpa [#allocation5], 0
    %s13 = scalar_lea.sflag [#allocation5], 1
    %14 = vsyncpa %s13, 0
    %15 = vsyncpa [#allocation8], 0
    %s16 = scalar_lea.sflag [#allocation8], 1
    %17 = vsyncpa %s16, 0
    %18 = vsyncpa [#allocation6], 0
    %s19 = scalar_lea.sflag [#allocation6], 1
    %20 = vsyncpa %s19, 0
    loop: start=0, step=1, limit=6
    $region2: #{tpu_custom_call.1} parent=1 // loop_pre_header
      _
    $region3: #{tpu_custom_call.1} parent=1 // loop_header
      %s22 = sphi 0, %s26
      %p23 = scmp.ge.s32.totalorder %s22, 6
      %s29 = sphi 0, %s48
      %s30 = sphi 0, %s44
      %s31 = sphi 0, %s40
      %s32 = sphi 0, %s29
      %s33 = sphi 0, %s30
      %s34 = sphi 0, %s31
      %s35 = sphi 0, %s32
      %s36 = sphi 0, %s33
      %s37 = sphi 0, %s34
      %s49 = sphi 0, %s49
      %s51 = sphi 0, %s49
      %s52 = sphi 0, %s51
      %s66 = sphi 0, %s52
      %s74 = sphi 0, %s76
      %s77 = sphi 0, %s74
      %s78 = sphi 0, %s77
      %s94 = sphi 0, %s78
      %s102 = sphi 0, %s104
      %s105 = sphi 0, %s102
      %s106 = sphi 0, %s105
      %s122 = sphi 0, %s106
      %s130 = sphi 0, %s132
      %s133 = sphi 0, %s130
      %s134 = sphi 0, %s133
      %s150 = sphi 0, %s134
      %s156 = sphi 0, %s158
      %s159 = sphi 0, %s156
      %s160 = sphi 0, %s159
      %s176 = sphi 0, %s160
      %s182 = sphi 0, %s184
      %s185 = sphi 0, %s182
      %s186 = sphi 0, %s185
      %s202 = sphi 0, %s186
      %s210 = sphi 0, %s212
      %s213 = sphi 0, %s210
      %s214 = sphi 0, %s213
      %s230 = sphi 0, %s214
    $region4: #{tpu_custom_call.1} parent=1 // loop_header_branch
      %25 = sbr.rel (%p23) target = $region8
    $region5: #{tpu_custom_call.1} parent=1 // loop_body
      %s27 = ssub.s32 %s22, 1
      %s28 = ssub.s32 %s22, 2
      %s38 = sadd.s32 1, %s31
      %p39 = scmp.ge.s32.totalorder %s38, 2
      %s40 = scalar_select %p39, 0, %s38
      %s41 = sadd.s32 1, %s30
      %s42 = scalar_select %p39, %s41, %s30
      %p43 = scmp.ge.s32.totalorder %s42, 2
      %s44 = scalar_select %p43, 0, %s42
      %s45 = sadd.s32 1, %s29
      %s46 = scalar_select %p43, %s45, %s29
      %p47 = scmp.ge.s32.totalorder %s46, 1
      %s48 = scalar_select %p47, 0, %s46
      %s50 = sadd.s32 %s49, 1
      %p53 = scmp.eq.s32.totalorder %s22, 3
      %p54 = scmp.ne.s32.totalorder %s49, %s51
      %p55 = scmp.eq.s32.totalorder %s22, 0
      %p56 = por %p54, %p55
      %p57 = scmp.ne.s32.totalorder %s49, %s51
      %p58 = scmp.eq.s32.totalorder %s27, 3
      %p59 = por %p57, %p58
      %p60 = scmp.ne.s32.totalorder %s51, %s52
      %p61 = scmp.eq.s32.totalorder %s27, 0
      %p62 = por %p60, %p61
      %p63 = scmp.ne.s32.totalorder %s51, %s52
      %p64 = scmp.eq.s32.totalorder %s28, 3
      %p65 = por %p63, %p64
      %p67 = scmp.ne.s32.totalorder %s52, %s66
      %p68 = scmp.eq.s32.totalorder %s28, 0
      %p69 = por %p67, %p68
      %s70 = ssub.s32 %s29, %s48
      %s71 = ssub.s32 %s31, %s40
      %s72 = sor.u32 %s70, %s71
      %p73 = scmp.eq.s32.totalorder %s72, 0
      %s75 = sadd.s32 %s74, 1
      %s76 = scalar_select %p73, %s74, %s75
      %p79 = pneg %p73
      %p80 = scmp.eq.s32.totalorder %s22, 3
      %p81 = por %p79, %p80
      %p82 = scmp.ne.s32.totalorder %s74, %s77
      %p83 = scmp.eq.s32.totalorder %s22, 0
      %p84 = por %p82, %p83
      %p85 = scmp.ne.s32.totalorder %s74, %s77
      %p86 = scmp.eq.s32.totalorder %s27, 3
      %p87 = por %p85, %p86
      %p88 = scmp.ne.s32.totalorder %s77, %s78
      %p89 = scmp.eq.s32.totalorder %s27, 0
      %p90 = por %p88, %p89
      %p91 = scmp.ne.s32.totalorder %s77, %s78
      %p92 = scmp.eq.s32.totalorder %s28, 3
      %p93 = por %p91, %p92
      %p95 = scmp.ne.s32.totalorder %s78, %s94
      %p96 = scmp.eq.s32.totalorder %s28, 0
      %p97 = por %p95, %p96
      %s98 = ssub.s32 %s30, %s44
      %s99 = ssub.s32 %s31, %s40
      %s100 = sor.u32 %s98, %s99
      %p101 = scmp.eq.s32.totalorder %s100, 0
      %s103 = sadd.s32 %s102, 1
      %s104 = scalar_select %p101, %s102, %s103
      %p107 = pneg %p101
      %p108 = scmp.eq.s32.totalorder %s22, 3
      %p109 = por %p107, %p108
      %p110 = scmp.ne.s32.totalorder %s102, %s105
      %p111 = scmp.eq.s32.totalorder %s22, 0
      %p112 = por %p110, %p111
      %p113 = scmp.ne.s32.totalorder %s102, %s105
      %p114 = scmp.eq.s32.totalorder %s27, 3
      %p115 = por %p113, %p114
      %p116 = scmp.ne.s32.totalorder %s105, %s106
      %p117 = scmp.eq.s32.totalorder %s27, 0
      %p118 = por %p116, %p117
      %p119 = scmp.ne.s32.totalorder %s105, %s106
      %p120 = scmp.eq.s32.totalorder %s28, 3
      %p121 = por %p119, %p120
      %p123 = scmp.ne.s32.totalorder %s106, %s122
      %p124 = scmp.eq.s32.totalorder %s28, 0
      %p125 = por %p123, %p124
      %s126 = ssub.s32 %s30, %s44
      %s127 = ssub.s32 %s31, %s40
      %s128 = sor.u32 %s126, %s127
      %p129 = scmp.eq.s32.totalorder %s128, 0
      %s131 = sadd.s32 %s130, 1
      %s132 = scalar_select %p129, %s130, %s131
      %p135 = pneg %p129
      %p136 = scmp.eq.s32.totalorder %s22, 3
      %p137 = por %p135, %p136
      %p138 = scmp.ne.s32.totalorder %s130, %s133
      %p139 = scmp.eq.s32.totalorder %s22, 0
      %p140 = por %p138, %p139
      %p141 = scmp.ne.s32.totalorder %s130, %s133
      %p142 = scmp.eq.s32.totalorder %s27, 3
      %p143 = por %p141, %p142
      %p144 = scmp.ne.s32.totalorder %s133, %s134
      %p145 = scmp.eq.s32.totalorder %s27, 0
      %p146 = por %p144, %p145
      %p147 = scmp.ne.s32.totalorder %s133, %s134
      %p148 = scmp.eq.s32.totalorder %s28, 3
      %p149 = por %p147, %p148
      %p151 = scmp.ne.s32.totalorder %s134, %s150
      %p152 = scmp.eq.s32.totalorder %s28, 0
      %p153 = por %p151, %p152
      %s154 = ssub.s32 %s30, %s44
      %p155 = scmp.eq.s32.totalorder %s154, 0
      %s157 = sadd.s32 %s156, 1
      %s158 = scalar_select %p155, %s156, %s157
      %p161 = pneg %p155
      %p162 = scmp.eq.s32.totalorder %s22, 3
      %p163 = por %p161, %p162
      %p164 = scmp.ne.s32.totalorder %s156, %s159
      %p165 = scmp.eq.s32.totalorder %s22, 0
      %p166 = por %p164, %p165
      %p167 = scmp.ne.s32.totalorder %s156, %s159
      %p168 = scmp.eq.s32.totalorder %s27, 3
      %p169 = por %p167, %p168
      %p170 = scmp.ne.s32.totalorder %s159, %s160
      %p171 = scmp.eq.s32.totalorder %s27, 0
      %p172 = por %p170, %p171
      %p173 = scmp.ne.s32.totalorder %s159, %s160
      %p174 = scmp.eq.s32.totalorder %s28, 3
      %p175 = por %p173, %p174
      %p177 = scmp.ne.s32.totalorder %s160, %s176
      %p178 = scmp.eq.s32.totalorder %s28, 0
      %p179 = por %p177, %p178
      %s180 = ssub.s32 %s30, %s44
      %p181 = scmp.eq.s32.totalorder %s180, 0
      %s183 = sadd.s32 %s182, 1
      %s184 = scalar_select %p181, %s182, %s183
      %p187 = pneg %p181
      %p188 = scmp.eq.s32.totalorder %s22, 3
      %p189 = por %p187, %p188
      %p190 = scmp.ne.s32.totalorder %s182, %s185
      %p191 = scmp.eq.s32.totalorder %s22, 0
      %p192 = por %p190, %p191
      %p193 = scmp.ne.s32.totalorder %s182, %s185
      %p194 = scmp.eq.s32.totalorder %s27, 3
      %p195 = por %p193, %p194
      %p196 = scmp.ne.s32.totalorder %s185, %s186
      %p197 = scmp.eq.s32.totalorder %s27, 0
      %p198 = por %p196, %p197
      %p199 = scmp.ne.s32.totalorder %s185, %s186
      %p200 = scmp.eq.s32.totalorder %s28, 3
      %p201 = por %p199, %p200
      %p203 = scmp.ne.s32.totalorder %s186, %s202
      %p204 = scmp.eq.s32.totalorder %s28, 0
      %p205 = por %p203, %p204
      %s206 = ssub.s32 %s29, %s48
      %s207 = ssub.s32 %s30, %s44
      %s208 = sor.u32 %s206, %s207
      %p209 = scmp.eq.s32.totalorder %s208, 0
      %s211 = sadd.s32 %s210, 1
      %s212 = scalar_select %p209, %s210, %s211
      %p215 = pneg %p209
      %p216 = scmp.eq.s32.totalorder %s22, 3
      %p217 = por %p215, %p216
      %p218 = scmp.ne.s32.totalorder %s210, %s213
      %p219 = scmp.eq.s32.totalorder %s22, 0
      %p220 = por %p218, %p219
      %p221 = scmp.ne.s32.totalorder %s210, %s213
      %p222 = scmp.eq.s32.totalorder %s27, 3
      %p223 = por %p221, %p222
      %p224 = scmp.ne.s32.totalorder %s213, %s214
      %p225 = scmp.eq.s32.totalorder %s27, 0
      %p226 = por %p224, %p225
      %p227 = scmp.ne.s32.totalorder %s213, %s214
      %p228 = scmp.eq.s32.totalorder %s28, 3
      %p229 = por %p227, %p228
      %p231 = scmp.ne.s32.totalorder %s214, %s230
      %p232 = scmp.eq.s32.totalorder %s28, 0
      %p233 = por %p231, %p232
      %p234 = scmp.le.s32.totalorder 1, %s22
      %p235 = scmp.lt.s32.totalorder %s22, 5
      %p236 = pnand %p234, %p235
      %p237 = pneg %p236
      // Predicated region
      $region9: #{tpu_custom_call.1} parent=5 // pred_check
        _
      $region10: #{tpu_custom_call.1} parent=5 // pred_check_branch
        %239 = sbr.rel (%p236) target = $region12
      $region11: #{tpu_custom_call.1} parent=5 // pred_region
        %s240 = ssub.s32 %s22, 1
        // Predicated region
        $region13: #{tpu_custom_call.1} parent=11 // pred_check
          %p241 = pneg %p62
        $region14: #{tpu_custom_call.1} parent=11 // pred_check_branch
          %243 = sbr.rel (%p241) target = $region16
        $region15: #{tpu_custom_call.1} parent=11 // pred_region
          _
        $region16: #{tpu_custom_call.1} parent=11 // pred_fallthru
          _
      $region12: #{tpu_custom_call.1} parent=5 // pred_fallthru
        _
      %p244 = scmp.lt.s32.totalorder %s22, 4
      // Predicated region
      $region17: #{tpu_custom_call.1} parent=5 // pred_check
        %p245 = pneg %p244
      $region18: #{tpu_custom_call.1} parent=5 // pred_check_branch
        %247 = sbr.rel (%p245) target = $region20
      $region19: #{tpu_custom_call.1} parent=5 // pred_region
        // Predicated region
        $region21: #{tpu_custom_call.1} parent=19 // pred_check
          %p248 = pneg %p84
        $region22: #{tpu_custom_call.1} parent=19 // pred_check_branch
          %250 = sbr.rel (%p248) target = $region24
        $region23: #{tpu_custom_call.1} parent=19 // pred_region
          %s251 = sand.u32 %s74, 1
          %s252 = scalar_lea.sflag [#allocation5], %s251
          %s253 = sand.u32 %s74, 1
          %s254 = smul.addr %s253, 8
          %s255 = scalar_lea.vmem [#allocation4], %s254
          %s257 = ssub.s32 128, 128
          %258 = vsyncadd %s252, %s257
          %s259 = smul.addr %s29, 2
          %s260 = sadd.s32 %s31, %s259
          %s261 = smul.addr %s260, 128
          %s262 = scalar_lea.hbm %s1, %s261
          %s264 = sshll.u32 %s255, 4
          %s265 = int_to_ptr.vmem [resolvable:$true] %s264
          %267 = dma.hbm_to_vmem [thread:$0]  %s262, 128, %s265, %s252
        $region24: #{tpu_custom_call.1} parent=19 // pred_fallthru
          _
        // Predicated region
        $region25: #{tpu_custom_call.1} parent=19 // pred_check
          %p268 = pneg %p112
        $region26: #{tpu_custom_call.1} parent=19 // pred_check_branch
          %270 = sbr.rel (%p268) target = $region28
        $region27: #{tpu_custom_call.1} parent=19 // pred_region
          %s271 = sand.u32 %s22, 1
          %s272 = scalar_lea.sflag [#allocation8], %s271
          %s273 = sand.u32 %s102, 1
          %s274 = smul.addr %s273, 128
          %s275 = scalar_lea.vmem [#allocation7], %s274
          %s276 = smul.u32 16, %s30
          %s278 = ssub.s32 2048, 2048
          %279 = vsyncadd %s272, %s278
          %s280 = smul.addr %s276, 2
          %s281 = sadd.s32 %s31, %s280
          %s282 = smul.addr %s281, 128
          %s283 = scalar_lea.hbm %s2, %s282
          %s284 = sshll.u32 %s275, 4
          %s285 = int_to_ptr.vmem [resolvable:$true] %s284
          %290 = dma.hbm_to_vmem [thread:$0]  %s283, 2048, %s285, %s272, 256, 128, 8
        $region28: #{tpu_custom_call.1} parent=19 // pred_fallthru
          _
        // Predicated region
        $region29: #{tpu_custom_call.1} parent=19 // pred_check
          %p291 = pneg %p140
        $region30: #{tpu_custom_call.1} parent=19 // pred_check_branch
          %293 = sbr.rel (%p291) target = $region32
        $region31: #{tpu_custom_call.1} parent=19 // pred_region
          %s294 = sand.u32 %s22, 1
          %s295 = scalar_lea.sflag [#allocation8], %s294
          %s296 = sand.u32 %s130, 1
          %s297 = smul.addr %s296, 128
          %s298 = scalar_lea.vmem [#allocation9], %s297
          %s299 = smul.u32 16, %s30
          %s301 = ssub.s32 2048, 2048
          %302 = vsyncadd %s295, %s301
          %s303 = smul.addr %s299, 2
          %s304 = sadd.s32 %s31, %s303
          %s305 = smul.addr %s304, 128
          %s306 = scalar_lea.hbm %s3, %s305
          %s307 = sshll.u32 %s298, 4
          %s308 = int_to_ptr.vmem [resolvable:$true] %s307
          %313 = dma.hbm_to_vmem [thread:$0]  %s306, 2048, %s308, %s295, 256, 128, 8
        $region32: #{tpu_custom_call.1} parent=19 // pred_fallthru
          _
        // Predicated region
        $region33: #{tpu_custom_call.1} parent=19 // pred_check
          %p314 = pneg %p166
        $region34: #{tpu_custom_call.1} parent=19 // pred_check_branch
          %316 = sbr.rel (%p314) target = $region36
        $region35: #{tpu_custom_call.1} parent=19 // pred_region
          %p317 = scmp.lt.s32.totalorder %s30, 1
          %s318 = scalar_select %p317, %s30, 1
          %s319 = scalar_lea.vmem %s4, %s318
        $region36: #{tpu_custom_call.1} parent=19 // pred_fallthru
          _
        // Predicated region
        $region37: #{tpu_custom_call.1} parent=19 // pred_check
          %p320 = pneg %p192
        $region38: #{tpu_custom_call.1} parent=19 // pred_check_branch
          %322 = sbr.rel (%p320) target = $region40
        $region39: #{tpu_custom_call.1} parent=19 // pred_region
          %p323 = scmp.lt.s32.totalorder %s30, 1
          %s324 = scalar_select %p323, %s30, 1
          %s325 = scalar_lea.vmem %s5, %s324
        $region40: #{tpu_custom_call.1} parent=19 // pred_fallthru
          _
      $region20: #{tpu_custom_call.1} parent=5 // pred_fallthru
        _
      %p326 = scmp.le.s32.totalorder 1, %s22
      %p327 = scmp.lt.s32.totalorder %s22, 5
      %p328 = pnand %p326, %p327
      %p329 = pneg %p328
      // Predicated region
      $region41: #{tpu_custom_call.1} parent=5 // pred_check
        _
      $region42: #{tpu_custom_call.1} parent=5 // pred_check_branch
        %331 = sbr.rel (%p328) target = $region44
      $region43: #{tpu_custom_call.1} parent=5 // pred_region
        %s332 = ssub.s32 %s22, 1
        %s333 = sand.u32 %s77, 1
        %s334 = scalar_lea.sflag [#allocation5], %s333
        %s335 = sand.u32 %s77, 1
        %s336 = smul.addr %s335, 8
        %s337 = scalar_lea.vmem [#allocation4], %s336
        // Predicated region
        $region45: #{tpu_custom_call.1} parent=43 // pred_check
          %p338 = pneg %p90
        $region46: #{tpu_custom_call.1} parent=43 // pred_check_branch
          %340 = sbr.rel (%p338) target = $region48
        $region47: #{tpu_custom_call.1} parent=43 // pred_region
          %341 = dma.done %s334, 128
        $region48: #{tpu_custom_call.1} parent=43 // pred_fallthru
          _
        %s342 = sand.u32 %s27, 1
        %s343 = scalar_lea.sflag [#allocation8], %s342
        %s344 = sand.u32 %s105, 1
        %s345 = smul.addr %s344, 128
        %s346 = scalar_lea.vmem [#allocation7], %s345
        // Predicated region
        $region49: #{tpu_custom_call.1} parent=43 // pred_check
          %p347 = pneg %p118
        $region50: #{tpu_custom_call.1} parent=43 // pred_check_branch
          %349 = sbr.rel (%p347) target = $region52
        $region51: #{tpu_custom_call.1} parent=43 // pred_region
          %350 = dma.done %s343, 2048
        $region52: #{tpu_custom_call.1} parent=43 // pred_fallthru
          _
        %s351 = sand.u32 %s27, 1
        %s352 = scalar_lea.sflag [#allocation8], %s351
        %s353 = sand.u32 %s133, 1
        %s354 = smul.addr %s353, 128
        %s355 = scalar_lea.vmem [#allocation9], %s354
        // Predicated region
        $region53: #{tpu_custom_call.1} parent=43 // pred_check
          %p356 = pneg %p146
        $region54: #{tpu_custom_call.1} parent=43 // pred_check_branch
          %358 = sbr.rel (%p356) target = $region56
        $region55: #{tpu_custom_call.1} parent=43 // pred_region
          %359 = dma.done %s352, 2048
        $region56: #{tpu_custom_call.1} parent=43 // pred_fallthru
          _
        %p360 = pneg %p62
        %p361 = pneg %p59
        %s362 = sand.u32 %s77, 1
        %s363 = scalar_lea.sflag [#allocation5], %s362
        %s364 = sand.u32 %s77, 1
        %s365 = smul.addr %s364, 8
        %s366 = scalar_lea.vmem [#allocation4], %s365
        %p367 = pneg %p90
        %p368 = pneg %p87
        %s369 = sand.u32 %s27, 1
        %s370 = scalar_lea.sflag [#allocation8], %s369
        %s371 = sand.u32 %s105, 1
        %s372 = smul.addr %s371, 128
        %s373 = scalar_lea.vmem [#allocation7], %s372
        %p374 = pneg %p118
        %p375 = pneg %p115
        %s376 = sand.u32 %s27, 1
        %s377 = scalar_lea.sflag [#allocation8], %s376
        %s378 = sand.u32 %s133, 1
        %s379 = smul.addr %s378, 128
        %s380 = scalar_lea.vmem [#allocation9], %s379
        %p381 = pneg %p146
        %p382 = pneg %p143
        %p383 = scmp.lt.s32.totalorder %s33, 1
        %s384 = scalar_select %p383, %s33, 1
        %s385 = scalar_lea.vmem %s4, %s384
        %p386 = pneg %p172
        %p387 = pneg %p169
        %p388 = scmp.lt.s32.totalorder %s33, 1
        %s389 = scalar_select %p388, %s33, 1
        %s390 = scalar_lea.vmem %s5, %s389
        %p391 = pneg %p198
        %p392 = pneg %p195
        %p393 = pneg %p226
        %p394 = pneg %p223
        %s395 = sand.u32 %s213, 1
        %s396 = scalar_lea.sflag [#allocation6], %s395
        %s397 = sand.u32 %s213, 1
        %s398 = smul.addr %s397, 8
        %s399 = scalar_lea.vmem [#allocation10], %s398
        %s400 = smul.u32 16, %s33
        %s401 = smul.u32 16, %s33
        %p402 = scmp.lt.s32.totalorder %s33, 1
        %s403 = scalar_select %p402, %s33, 1
        %s404 = scalar_lea.vmem %s4, %s403
        %p405 = scmp.lt.s32.totalorder %s33, 1
        %s406 = scalar_select %p405, %s33, 1
        %s407 = scalar_lea.vmem %s5, %s406
        %p408 = scmp.eq.s32.totalorder %s34, 0
        // Predicated region
        $region57: #{tpu_custom_call.1} parent=43 // pred_check
          %p409 = pneg %p408
        $region58: #{tpu_custom_call.1} parent=43 // pred_check_branch
          %411 = sbr.rel (%p409) target = $region60
        $region59: #{tpu_custom_call.1} parent=43 // pred_region
          %412 = vst [vmem:[#allocation2] sm:$0xff] 0.0
        $region60: #{tpu_custom_call.1} parent=43 // pred_fallthru
          _
        %s413 = sld [smem:[#allocation3]]
        %v414 = vld [vmem:[%s346] sm:$0xff]
        %v415 = vld [vmem:[%s346 + $0x8] sm:$0xff]
        %v416 = vld [vmem:[%s346 + $0x10] sm:$0xff]
        %v417 = vld [vmem:[%s346 + $0x18] sm:$0xff]
        %v418 = vld [vmem:[%s346 + $0x20] sm:$0xff]
        %v419 = vld [vmem:[%s346 + $0x28] sm:$0xff]
        %v420 = vld [vmem:[%s346 + $0x30] sm:$0xff]
        %v421 = vld [vmem:[%s346 + $0x38] sm:$0xff]
        %v422 = vld [vmem:[%s346 + $0x40] sm:$0xff]
        %v423 = vld [vmem:[%s346 + $0x48] sm:$0xff]
        %v424 = vld [vmem:[%s346 + $0x50] sm:$0xff]
        %v425 = vld [vmem:[%s346 + $0x58] sm:$0xff]
        %v426 = vld [vmem:[%s346 + $0x60] sm:$0xff]
        %v427 = vld [vmem:[%s346 + $0x68] sm:$0xff]
        %v428 = vld [vmem:[%s346 + $0x70] sm:$0xff]
        %v429 = vld [vmem:[%s346 + $0x78] sm:$0xff]
        %p430 = scmp.lt.f32.partialorder %s413, 1.0
        %s431 = ssub.f32 1.0, %s413
        %v432 = vstv %s431
        %v433 = vrcp.pop %v432
        %s434 = vtos %v433
        %s435 = scalar_select %p430, %s434, 0.0
        %v436 = vld [vmem:[%s355] sm:$0xff]
        %v437 = vld [vmem:[%s355 + $0x8] sm:$0xff]
        %v438 = vld [vmem:[%s355 + $0x10] sm:$0xff]
        %v439 = vld [vmem:[%s355 + $0x18] sm:$0xff]
        %v440 = vld [vmem:[%s355 + $0x20] sm:$0xff]
        %v441 = vld [vmem:[%s355 + $0x28] sm:$0xff]
        %v442 = vld [vmem:[%s355 + $0x30] sm:$0xff]
        %v443 = vld [vmem:[%s355 + $0x38] sm:$0xff]
        %v444 = vld [vmem:[%s355 + $0x40] sm:$0xff]
        %v445 = vld [vmem:[%s355 + $0x48] sm:$0xff]
        %v446 = vld [vmem:[%s355 + $0x50] sm:$0xff]
        %v447 = vld [vmem:[%s355 + $0x58] sm:$0xff]
        %v448 = vld [vmem:[%s355 + $0x60] sm:$0xff]
        %v449 = vld [vmem:[%s355 + $0x68] sm:$0xff]
        %v450 = vld [vmem:[%s355 + $0x70] sm:$0xff]
        %v451 = vld [vmem:[%s355 + $0x78] sm:$0xff]
        %v452 = vstv %s413
        %vm453 = vcmp.ge.f32.partialorder %v436, %v452
        %vm454 = vcmp.ge.f32.partialorder %v437, %v452
        %vm455 = vcmp.ge.f32.partialorder %v438, %v452
        %vm456 = vcmp.ge.f32.partialorder %v439, %v452
        %vm457 = vcmp.ge.f32.partialorder %v440, %v452
        %vm458 = vcmp.ge.f32.partialorder %v441, %v452
        %vm459 = vcmp.ge.f32.partialorder %v442, %v452
        %vm460 = vcmp.ge.f32.partialorder %v443, %v452
        %vm461 = vcmp.ge.f32.partialorder %v444, %v452
        %vm462 = vcmp.ge.f32.partialorder %v445, %v452
        %vm463 = vcmp.ge.f32.partialorder %v446, %v452
        %vm464 = vcmp.ge.f32.partialorder %v447, %v452
        %vm465 = vcmp.ge.f32.partialorder %v448, %v452
        %vm466 = vcmp.ge.f32.partialorder %v449, %v452
        %vm467 = vcmp.ge.f32.partialorder %v450, %v452
        %vm468 = vcmp.ge.f32.partialorder %v451, %v452
        %v469 = vstv %s435
        %v470 = vmul.f32 %v414, %v469
        %v471 = vmul.f32 %v415, %v469
        %v472 = vmul.f32 %v416, %v469
        %v473 = vmul.f32 %v417, %v469
        %v474 = vmul.f32 %v418, %v469
        %v475 = vmul.f32 %v419, %v469
        %v476 = vmul.f32 %v420, %v469
        %v477 = vmul.f32 %v421, %v469
        %v478 = vmul.f32 %v422, %v469
        %v479 = vmul.f32 %v423, %v469
        %v480 = vmul.f32 %v424, %v469
        %v481 = vmul.f32 %v425, %v469
        %v482 = vmul.f32 %v426, %v469
        %v483 = vmul.f32 %v427, %v469
        %v484 = vmul.f32 %v428, %v469
        %v485 = vmul.f32 %v429, %v469
        %v486 = vsel %vm453, %v470, 0.0
        %v487 = vsel %vm454, %v471, 0.0
        %v488 = vsel %vm455, %v472, 0.0
        %v489 = vsel %vm456, %v473, 0.0
        %v490 = vsel %vm457, %v474, 0.0
        %v491 = vsel %vm458, %v475, 0.0
        %v492 = vsel %vm459, %v476, 0.0
        %v493 = vsel %vm460, %v477, 0.0
        %v494 = vsel %vm461, %v478, 0.0
        %v495 = vsel %vm462, %v479, 0.0
        %v496 = vsel %vm463, %v480, 0.0
        %v497 = vsel %vm464, %v481, 0.0
        %v498 = vsel %vm465, %v482, 0.0
        %v499 = vsel %vm466, %v483, 0.0
        %v500 = vsel %vm467, %v484, 0.0
        %v501 = vsel %vm468, %v485, 0.0
        %v502 = vld [vmem:[%s337] sm:$0xff]
        %v503 = vld [vmem:[#allocation2] sm:$0xff]
        %504 = vmatprep.subr.mxu0 0.0
        %505 = vmatpush1.xpose.msra.mxu0 %v501
        %506 = vmatprep.subr.mxu0 0.0
        %507 = vmatpush1.xpose.msra.mxu0 %v500
        %508 = vmatprep.subr.mxu0 0.0
        %509 = vmatpush1.xpose.msra.mxu0 %v499
        %510 = vmatprep.subr.mxu0 0.0
        %511 = vmatpush1.xpose.msra.mxu0 %v498
        %512 = vmatprep.subr.mxu0 0.0
        %513 = vmatpush1.xpose.msra.mxu0 %v497
        %514 = vmatprep.subr.mxu0 0.0
        %515 = vmatpush1.xpose.msra.mxu0 %v496
        %516 = vmatprep.subr.mxu0 0.0
        %517 = vmatpush1.xpose.msra.mxu0 %v495
        %518 = vmatprep.subr.mxu0 0.0
        %519 = vmatpush1.xpose.msra.mxu0 %v494
        %520 = vmatprep.subr.mxu0 0.0
        %521 = vmatpush1.xpose.msra.mxu0 %v493
        %522 = vmatprep.subr.mxu0 0.0
        %523 = vmatpush1.xpose.msra.mxu0 %v492
        %524 = vmatprep.subr.mxu0 0.0
        %525 = vmatpush1.xpose.msra.mxu0 %v491
        %526 = vmatprep.subr.mxu0 0.0
        %527 = vmatpush1.xpose.msra.mxu0 %v490
        %528 = vmatprep.subr.mxu0 0.0
        %529 = vmatpush1.xpose.msra.mxu0 %v489
        %530 = vmatprep.subr.mxu0 0.0
        %531 = vmatpush1.xpose.msra.mxu0 %v488
        %532 = vmatprep.subr.mxu0 0.0
        %533 = vmatpush1.xpose.msra.mxu0 %v487
        %534 = vmatprep.subr.mxu0 0.0
        %535 = vmatpush1.xpose.msra.mxu0 %v486
        %536 = vmatprep.subr.mxu0 0.0
        %537 = vmatpush2.xpose.msra.mxu0 0.0
        %538 = vmatprep.subr.mxu0 0.0
        %539 = vmatpush2.xpose.msra.mxu0 0.0
        %540 = vmatprep.subr.mxu0 0.0
        %541 = vmatpush2.xpose.msra.mxu0 0.0
        %542 = vmatprep.subr.mxu0 0.0
        %543 = vmatpush2.xpose.msra.mxu0 0.0
        %544 = vmatprep.subr.mxu0 0.0
        %545 = vmatpush2.xpose.msra.mxu0 0.0
        %546 = vmatprep.subr.mxu0 0.0
        %547 = vmatpush2.xpose.msra.mxu0 0.0
        %548 = vmatprep.subr.mxu0 0.0
        %549 = vmatpush2.xpose.msra.mxu0 0.0
        %550 = vmatprep.subr.mxu0 0.0
        %551 = vmatpush2.xpose.msra.mxu0 0.0
        %552 = vmatprep.subr.mxu0 0.0
        %553 = vmatpush2.xpose.msra.mxu0 0.0
        %554 = vmatprep.subr.mxu0 0.0
        %555 = vmatpush2.xpose.msra.mxu0 0.0
        %556 = vmatprep.subr.mxu0 0.0
        %557 = vmatpush2.xpose.msra.mxu0 0.0
        %558 = vmatprep.subr.mxu0 0.0
        %559 = vmatpush2.xpose.msra.mxu0 0.0
        %560 = vmatprep.subr.mxu0 0.0
        %561 = vmatpush2.xpose.msra.mxu0 0.0
        %562 = vmatprep.subr.mxu0 0.0
        %563 = vmatpush2.xpose.msra.mxu0 0.0
        %564 = vmatprep.subr.mxu0 0.0
        %565 = vmatpush2.xpose.msra.mxu0 0.0
        %566 = vmatprep.subr.mxu0 0.0
        %567 = vmatpush2.xpose.msra.mxu0 0.0
        %568 = vmatprep.mubr.f32.mxu0 0.0
        %569 = vmatmul.mubr.f32.gmra.mxu0 %v502
        %v570 = vpop.f32.mrf.mxu0
        %v571 = vadd.f32 0.0, %v570
        %v572 = vpop.f32.mrf.mxu0
        %573 = vdwg.mxu0
        %v574 = vadd.f32 %v503, %v571
        %575 = vst [vmem:[#allocation2] sm:$0xff] %v574
        %p576 = scmp.eq.s32.totalorder %s34, 1
        // Predicated region
        $region61: #{tpu_custom_call.1} parent=43 // pred_check
          %p577 = pneg %p576
        $region62: #{tpu_custom_call.1} parent=43 // pred_check_branch
          %579 = sbr.rel (%p577) target = $region64
        $region63: #{tpu_custom_call.1} parent=43 // pred_region
          %v580 = vld [vmem:[%s404] sm:$0x1]
          %v581 = vld [vmem:[%s407] sm:$0x1]
          %vm582 = vcmp.ge.f32.partialorder %v581, %v452
          %v583 = vmul.f32 %v580, %v469
          %v584 = vsel %vm582, %v583, 0.0
          %v585 = vld [vmem:[#allocation2] sm:$0xff]
          %v587 = vlaneseq
          %v588 = vshrl.u32 %v587, 7
          %v589 = vsub.s32 0, %v588
          %v590 = vrot.slane %v584, %v589
          %v592 = vadd.f32 %v585, %v590
          %593 = vst [vmem:[%s399] sm:$0xff] %v592
        $region64: #{tpu_custom_call.1} parent=43 // pred_fallthru
          _
        %s594 = sand.u32 %s213, 1
        %s595 = scalar_lea.sflag [#allocation6], %s594
        %s596 = sand.u32 %s213, 1
        %s597 = smul.addr %s596, 8
        %s598 = scalar_lea.vmem [#allocation10], %s597
        // Predicated region
        $region65: #{tpu_custom_call.1} parent=43 // pred_check
          %p599 = pneg %p223
        $region66: #{tpu_custom_call.1} parent=43 // pred_check_branch
          %601 = sbr.rel (%p599) target = $region68
        $region67: #{tpu_custom_call.1} parent=43 // pred_region
          %s603 = ssub.s32 128, 128
          %604 = vsyncadd %s595, %s603
          %s605 = smul.addr %s32, 2
          %s606 = sadd.s32 %s33, %s605
          %s607 = smul.addr %s606, 128
          %s608 = scalar_lea.hbm %s6, %s607
          %s610 = sshll.u32 %s598, 4
          %s611 = int_to_ptr.vmem [resolvable:$true] %s610
          %613 = dma.vmem_to_hbm [thread:$0]  %s611, 128, %s608, %s595
        $region68: #{tpu_custom_call.1} parent=43 // pred_fallthru
          _
      $region44: #{tpu_custom_call.1} parent=5 // pred_fallthru
        _
      %p614 = scmp.le.s32.totalorder 2, %s22
      // Predicated region
      $region69: #{tpu_custom_call.1} parent=5 // pred_check
        %p615 = pneg %p614
      $region70: #{tpu_custom_call.1} parent=5 // pred_check_branch
        %617 = sbr.rel (%p615) target = $region72
      $region71: #{tpu_custom_call.1} parent=5 // pred_region
        %s618 = ssub.s32 %s22, 2
        // Predicated region
        $region73: #{tpu_custom_call.1} parent=71 // pred_check
          %p619 = pneg %p229
        $region74: #{tpu_custom_call.1} parent=71 // pred_check_branch
          %621 = sbr.rel (%p619) target = $region76
        $region75: #{tpu_custom_call.1} parent=71 // pred_region
          %s622 = sand.u32 %s214, 1
          %s623 = scalar_lea.sflag [#allocation6], %s622
          %s624 = sand.u32 %s214, 1
          %s625 = smul.addr %s624, 8
          %s626 = scalar_lea.vmem [#allocation10], %s625
          %627 = dma.done %s623, 128
        $region76: #{tpu_custom_call.1} parent=71 // pred_fallthru
          _
      $region72: #{tpu_custom_call.1} parent=5 // pred_fallthru
        _
    $region6: #{tpu_custom_call.1} parent=1 // loop_footer
      %s26 = sadd.s32 1, %s22
    $region7: #{tpu_custom_call.1} parent=1 // loop_footer_branch
      %21 = sbr.rel target = $region3
    $region8: #{tpu_custom_call.1} parent=1 // loop_exit
      _
    %628 = vsyncpa [#allocation5], 1
    %s629 = scalar_lea.sflag [#allocation5], 1
    %630 = vsyncpa %s629, 1
    %631 = vsyncpa [#allocation8], 1
    %s632 = scalar_lea.sflag [#allocation8], 1
    %633 = vsyncpa %s632, 1
    %634 = vsyncpa [#allocation6], 1
    %s635 = scalar_lea.sflag [#allocation6], 1
    %636 = vsyncpa %s635, 1

</llo_original>
